<compile_context>
chip_gen: v7x
topology: tpu7x:2x2x1
jax: 0.10.0
libtpu: 0.0.40
codegen_flags: <defaults>
</compile_context>

<pallas_src>
import functools

import jax
import jax.numpy as jnp
import numpy as np
from jax.experimental import pallas as pl
from jax.experimental.pallas import tpu as pltpu


def _round_up(x, m):
    return (x + m - 1) // m * m


def _vmem_capacity_bytes():
    """Per-core VMEM capacity; conservative fallback if the query fails."""
    try:
        return int(pltpu.get_tpu_info().vmem_capacity_bytes)
    except Exception:
        return 64 << 20  # v7x per-TensorCore VMEM (smallest of the targets)


def _choose_block_m(na, n, d, feat_bytes, mask_bytes, avail_bytes):
    """Largest anchor tile whose per-step working set fits the available VMEM."""
    best = 8
    for tm in (8, 16, 32, 64, 128, 256, 512, 1024):
        streamed = 2 * tm * (d * feat_bytes + 4 * 128 * 4 + n * mask_bytes)  # dbl-buffered
        temps = 5 * tm * n * 4                                               # f32 temporaries
        if streamed + temps <= avail_bytes:
            best = tm
        else:
            break
    return min(best, max(8, _round_up(na, 8)))


def _vmem_limit(n, d, block_m, feat_bytes, mask_bytes, capacity, resident_bufs):
    """Explicit scoped-VMEM request, clamped to ~90% of the real capacity."""
    resident = resident_bufs * (n * d * feat_bytes + 8 * _round_up(n, 128) * 4)
    streamed = 2 * block_m * (d * feat_bytes + 4 * 128 * 4 + n * mask_bytes)
    temps = 5 * block_m * n * 4
    est = resident + streamed + temps + (4 << 20)
    return int(min(max(int(est * 1.5), 32 << 20), int(capacity * 0.9)))


def _resident_spec(block_shape, *, single_buffer):
    """Index-invariant (resident) input; request single buffering when possible."""
    if single_buffer and hasattr(pl, "Buffered"):
        return pl.BlockSpec(block_shape, lambda i: (0, 0),
                            pipeline_mode=pl.Buffered(1))
    return pl.BlockSpec(block_shape, lambda i: (0, 0))


def _tile_loss(z, pos, not_self, inv_cnt, row_ids, num_anchors, loss_scale):
    """Per-row SupCon loss for one [TM, N] tile of (already 1/T-scaled) logits."""
    z_max = jnp.max(z, axis=1, keepdims=True)            # .detach(): forward-identical
    y = z - z_max                                         # shifted logits
    zeros = jnp.zeros_like(y)
    denom = jnp.sum(jnp.where(not_self, jnp.exp(y), zeros), axis=1, keepdims=True)
    sum_pos_y = jnp.sum(jnp.where(pos, y, zeros), axis=1, keepdims=True)
    # mean over positives of log_prob == sum(pos*y)/cnt - log(denom); no [TM,N]
    # log_prob temp.  Anchors with zero positives give 0*inf = NaN, matching
    # the PyTorch reference; padded rows have inv_cnt == 0 and are zeroed below.
    mean_log_prob_pos = sum_pos_y * inv_cnt - jnp.log(denom)
    loss_row = loss_scale * mean_log_prob_pos
    return jnp.where(row_ids < num_anchors, loss_row, jnp.zeros_like(loss_row))


def _supcon_labels_kernel(alab_ref, clab_ref, inv_cnt_ref, a_ref, c_ref, loss_ref, *,
                          loss_scale, num_anchors, block_m):
    row0 = pl.program_id(0) * block_m
    z = jax.lax.dot_general(a_ref[...], c_ref[...], (((1,), (1,)), ((), ())),
                            preferred_element_type=jnp.float32)    # [TM, N] on MXU
    tm, n = z.shape
    row_ids = row0 + jax.lax.broadcasted_iota(jnp.int32, (tm, 1), 0)
    col_ids = jax.lax.broadcasted_iota(jnp.int32, (1, n), 1)
    not_self = col_ids != row_ids                     # broadcast -> [TM, N] bool
    pos = jnp.logical_and(alab_ref[...] == clab_ref[...], not_self)
    loss_ref[...] = _tile_loss(z, pos, not_self, inv_cnt_ref[...],
                               row_ids, num_anchors, loss_scale)


def _supcon_mask_kernel(inv_cnt_ref, a_ref, c_ref, mask_ref, loss_ref, *,
                        loss_scale, num_anchors, block_m):
    row0 = pl.program_id(0) * block_m
    z = jax.lax.dot_general(a_ref[...], c_ref[...], (((1,), (1,)), ((), ())),
                            preferred_element_type=jnp.float32)
    tm, n = z.shape
    row_ids = row0 + jax.lax.broadcasted_iota(jnp.int32, (tm, 1), 0)
    col_ids = jax.lax.broadcasted_iota(jnp.int32, (1, n), 1)
    not_self = col_ids != row_ids
    pos = jnp.logical_and(mask_ref[...] != 0, not_self)   # int8 mask -> bool select
    loss_ref[...] = _tile_loss(z, pos, not_self, inv_cnt_ref[...],
                               row_ids, num_anchors, loss_scale)


def supcon_loss(features, labels=None, mask=None, *, temperature=0.07,
                contrast_mode='all', base_temperature=0.07,
                feature_dtype=jnp.bfloat16, block_m=None):
    """JAX/Pallas equivalent of SupConLoss.forward.

    features: [bsz, n_views, ...]; labels: [bsz] int; mask: [bsz, bsz]
    (treated as binary, as in the reference docstring).
    """
    if features.ndim < 3:
        raise ValueError('`features` needs to be [bsz, n_views, ...]')
    if features.ndim > 3:
        features = features.reshape(features.shape[0], features.shape[1], -1)
    bsz, n_views, dim = features.shape
    if labels is not None and mask is not None:
        raise ValueError('Cannot define both `labels` and `mask`')

    # view-major flattening == torch.cat(torch.unbind(features, dim=1), dim=0)
    contrast_feature = jnp.swapaxes(features, 0, 1).reshape(n_views * bsz, dim)
    if contrast_mode == 'one':
        anchor_feature = features[:, 0]
        anchor_count = 1
    elif contrast_mode == 'all':
        anchor_feature = contrast_feature
        anchor_count = n_views
    else:
        raise ValueError(f'Unknown mode: {contrast_mode}')

    n = bsz * n_views
    na = bsz * anchor_count

    use_labels_path = mask is None
    feat_bytes = jnp.dtype(feature_dtype).itemsize
    mask_bytes = 0 if use_labels_path else 1          # int8 mask on the fallback path

    capacity = _vmem_capacity_bytes()
    budget = int(capacity * 0.75)
    # Worst-case resident footprint (double-buffered contrast + labels row).
    resident_est = 2 * (n * dim * feat_bytes + 8 * _round_up(n, 128) * 4)
    if block_m is None:
        block_m = _choose_block_m(na, n, dim, feat_bytes, mask_bytes,
                                  max(budget - resident_est, 4 << 20))
    block_m = max(8, _round_up(int(block_m), 8))
    block_m = min(block_m, _round_up(na, 8))
    na8 = _round_up(na, 8)
    if na8 >= 16:
        # Keep >=2 grid steps so the "parallel" grid axis can shard across
        # v7x's two TensorCores (no effect on single-TC v5e/v6e).
        block_m = min(block_m, _round_up(na8 // 2, 8))
    na_pad = _round_up(na, block_m)
    grid = (na_pad // block_m,)

    # Fold 1/T into the small anchor operand in f32 *before* the feature cast.
    anchor_scaled = anchor_feature.astype(jnp.float32) * (1.0 / float(temperature))
    anchor_p = jnp.pad(anchor_scaled.astype(feature_dtype), ((0, na_pad - na), (0, 0)))
    contrast_f = contrast_feature.astype(feature_dtype)

    loss_scale = float(-(temperature / base_temperature))

    # Exact per-anchor positive counts (and 1/count) precomputed on the XLA side.
    if use_labels_path:
        if labels is None:
            labels_eff = jnp.arange(bsz, dtype=jnp.int32)   # SimCLR == unique labels
        else:
            labels_eff = labels.reshape(-1).astype(jnp.int32)
            if labels_eff.shape[0] != bsz:
                raise ValueError('Num of labels does not match num of features')
        same = labels_eff[:, None] == labels_eff[None, :]
        pos_cnt = n_views * jnp.sum(same, axis=1).astype(jnp.float32) - 1.0
    else:
        # NOTE: mask treated as binary {0,1} (as the reference docstring states).
        mask_bin = mask != 0
        pos_cnt = (n_views * jnp.sum(mask_bin, axis=1).astype(jnp.float32)
                   - jnp.diagonal(mask_bin).astype(jnp.float32))
    pos_cnt_anchor = jnp.tile(pos_cnt, anchor_count)         # [na]
    # 1/0 -> inf -> NaN downstream for anchors with no positives (PyTorch parity).
    inv_cnt = jnp.pad(1.0 / pos_cnt_anchor, (0, na_pad - na)).reshape(na_pad, 1)
    inv_cnt = inv_cnt.astype(jnp.float32)

    mask_stream_bytes = 0 if use_labels_path else na_pad * n
    cost = pl.CostEstimate(
        flops=int(2 * na_pad * n * dim),
        transcendentals=int(na_pad * n),
        bytes_accessed=int((na_pad + n) * dim * feat_bytes + n * 4
                           + na_pad * 12 + mask_stream_bytes))

    out_shape = jax.ShapeDtypeStruct((na_pad, 1), jnp.float32)
    out_spec = pl.BlockSpec((block_m, 1), lambda i: (i, 0))
    common = dict(loss_scale=loss_scale, num_anchors=na, block_m=block_m)

    if use_labels_path:
        contrast_labels = jnp.tile(labels_eff, n_views).reshape(1, n)       # [1, N]
        anchor_labels = contrast_labels.reshape(-1)[:na]
        anchor_labels = jnp.pad(anchor_labels, (0, na_pad - na),
                                constant_values=-1).reshape(na_pad, 1)      # [Na_pad, 1]
        kernel = functools.partial(_supcon_labels_kernel, **common)
        operands = (anchor_labels, contrast_labels, inv_cnt, anchor_p, contrast_f)

        def build(single_buffer):
            in_specs = [
                pl.BlockSpec((block_m, 1), lambda i: (i, 0)),    # anchor labels
                _resident_spec((1, n), single_buffer=single_buffer),   # contrast labels
                pl.BlockSpec((block_m, 1), lambda i: (i, 0)),    # 1/pos_cnt
                pl.BlockSpec((block_m, dim), lambda i: (i, 0)),  # anchor tile
                _resident_spec((n, dim), single_buffer=single_buffer),  # contrast (res.)
            ]
            cparams = pltpu.CompilerParams(
                dimension_semantics=("parallel",),
                vmem_limit_bytes=_vmem_limit(n, dim, block_m, feat_bytes, mask_bytes,
                                             capacity, 1 if single_buffer else 2))
            return pl.pallas_call(kernel, out_shape=out_shape, grid=grid,
                                  in_specs=in_specs, out_specs=out_spec,
                                  compiler_params=cparams, cost_estimate=cost)
    else:
        # Column-tiled binary mask as int8.  If block_m divides bsz we avoid the
        # anchor_count-times row replication entirely via a modulo index_map.
        col_mask = jnp.tile((mask != 0).astype(jnp.int8), (1, n_views))     # [bsz, N]
        if bsz % block_m == 0:
            mask_arr = col_mask
            row_blocks = bsz // block_m
            mask_index_map = lambda i: (i % row_blocks, 0)
        else:
            mask_arr = jnp.pad(jnp.tile(col_mask, (anchor_count, 1)),
                               ((0, na_pad - na), (0, 0)))                  # [Na_pad, N]
            mask_index_map = lambda i: (i, 0)
        kernel = functools.partial(_supcon_mask_kernel, **common)
        operands = (inv_cnt, anchor_p, contrast_f, mask_arr)

        def build(single_buffer):
            in_specs = [
                pl.BlockSpec((block_m, 1), lambda i: (i, 0)),    # 1/pos_cnt
                pl.BlockSpec((block_m, dim), lambda i: (i, 0)),  # anchor tile
                _resident_spec((n, dim), single_buffer=single_buffer),  # contrast (res.)
                pl.BlockSpec((block_m, n), mask_index_map),      # int8 positive mask
            ]
            cparams = pltpu.CompilerParams(
                dimension_semantics=("parallel",),
                vmem_limit_bytes=_vmem_limit(n, dim, block_m, feat_bytes, mask_bytes,
                                             capacity, 1 if single_buffer else 2))
            return pl.pallas_call(kernel, out_shape=out_shape, grid=grid,
                                  in_specs=in_specs, out_specs=out_spec,
                                  compiler_params=cparams, cost_estimate=cost)

    try:
        per_row = build(True)(*operands)
    except Exception:
        # pl.Buffered(1) single-buffering of the resident contrast may be
        # unsupported on some jax versions; retry with default double buffering.
        per_row = build(False)(*operands)

    # loss.view(anchor_count, batch_size).mean() == mean over all Na anchors.
    return jnp.sum(per_row) / na


def _supcon_loss_ref(features, labels=None, mask=None, *, temperature=0.07,
                     contrast_mode='all', base_temperature=0.07):
    """Pure-JAX reference mirroring the PyTorch module (f32 end-to-end)."""
    bsz, n_views = features.shape[0], features.shape[1]
    feats = features.reshape(bsz, n_views, -1).astype(jnp.float32)
    if labels is None and mask is None:
        base = jnp.eye(bsz, dtype=jnp.float32)
    elif labels is not None:
        lab = labels.reshape(-1, 1)
        base = (lab == lab.T).astype(jnp.float32)
    else:
        base = mask.astype(jnp.float32)
    contrast = jnp.concatenate([feats[:, v] for v in range(n_views)], axis=0)
    if contrast_mode == 'one':
        anchor = feats[:, 0]
        anchor_count = 1
    else:
        anchor = contrast
        anchor_count = n_views
    logits = anchor @ contrast.T / temperature
    logits = logits - jnp.max(logits, axis=1, keepdims=True)
    m = jnp.tile(base, (anchor_count, n_views))
    na = anchor.shape[0]
    lm = jnp.ones_like(m).at[jnp.arange(na), jnp.arange(na)].set(0.0)
    m = m * lm
    exp_logits = jnp.exp(logits) * lm
    log_prob = logits - jnp.log(exp_logits.sum(1, keepdims=True))
    mean_log_prob_pos = (m * log_prob).sum(1) / m.sum(1)
    loss = -(temperature / base_temperature) * mean_log_prob_pos
    return loss.mean()


if __name__ == "__main__":
    key = jax.random.PRNGKey(0)
    k1, k2, k3, k4 = jax.random.split(key, 4)

    bsz, n_views, dim = 10, 2, 32
    feats = jax.random.normal(k1, (bsz, n_views, dim), dtype=jnp.float32)
    feats = feats / jnp.linalg.norm(feats, axis=-1, keepdims=True)
    labels = jax.random.randint(k2, (bsz,), 0, 4)

    # 1) supervised, contrast_mode='all', f32 features (exact 1/pos_cnt now)
    out = jax.block_until_ready(supcon_loss(feats, labels=labels,
                                            feature_dtype=jnp.float32))
    ref = _supcon_loss_ref(feats, labels=labels)
    np.testing.assert_allclose(np.asarray(out), np.asarray(ref), rtol=5e-3, atol=5e-3)

    # 2) supervised, default bf16 MXU path (loose: bf16 operand rounding)
    out_bf16 = jax.block_until_ready(supcon_loss(feats, labels=labels))
    np.testing.assert_allclose(np.asarray(out_bf16), np.asarray(ref),
                               rtol=1e-1, atol=5e-2)

    # 3) unsupervised SimCLR (labels=None, mask=None)
    out_u = jax.block_until_ready(supcon_loss(feats, feature_dtype=jnp.float32))
    ref_u = _supcon_loss_ref(feats)
    np.testing.assert_allclose(np.asarray(out_u), np.asarray(ref_u),
                               rtol=5e-3, atol=5e-3)

    # 4) explicit user-supplied mask path (mask == label-equality matrix),
    #    anchor-tiled int8 mask fallback (bsz not divisible by block_m)
    user_mask = (labels.reshape(-1, 1) == labels.reshape(1, -1)).astype(jnp.float32)
    out_m = jax.block_until_ready(supcon_loss(feats, mask=user_mask,
                                              feature_dtype=jnp.float32))
    np.testing.assert_allclose(np.asarray(out_m), np.asarray(ref),
                               rtol=5e-3, atol=5e-3)

    # 5) contrast_mode='one'
    out_one = jax.block_until_ready(supcon_loss(feats, labels=labels,
                                                contrast_mode='one',
                                                feature_dtype=jnp.float32))
    ref_one = _supcon_loss_ref(feats, labels=labels, contrast_mode='one')
    np.testing.assert_allclose(np.asarray(out_one), np.asarray(ref_one),
                               rtol=5e-3, atol=5e-3)

    # 6) multi-tile grid + anchor padding (Na=20, block_m=8 -> 3 tiles, 4 pad rows)
    out_t = jax.block_until_ready(supcon_loss(feats, labels=labels,
                                              feature_dtype=jnp.float32, block_m=8))
    np.testing.assert_allclose(np.asarray(out_t), np.asarray(ref),
                               rtol=5e-3, atol=5e-3)

    # 7) mask path with block_m | bsz -> non-replicated [bsz, N] int8 mask via
    #    modulo index_map (bsz=16, block_m=8 -> 4 grid steps, 2 mask row-blocks)
    bsz2 = 16
    feats2 = jax.random.normal(k3, (bsz2, n_views, dim), dtype=jnp.float32)
    feats2 = feats2 / jnp.linalg.norm(feats2, axis=-1, keepdims=True)
    labels2 = jax.random.randint(k4, (bsz2,), 0, 4)
    mask2 = (labels2.reshape(-1, 1) == labels2.reshape(1, -1)).astype(jnp.float32)
    out_m2 = jax.block_until_ready(supcon_loss(feats2, mask=mask2,
                                               feature_dtype=jnp.float32, block_m=8))
    ref_m2 = _supcon_loss_ref(feats2, mask=mask2)
    np.testing.assert_allclose(np.asarray(out_m2), np.asarray(ref_m2),
                               rtol=5e-3, atol=5e-3)

    print("KERNEL_OK")
</pallas_src>

<mosaic_0001>
module attributes {stable_mosaic.version = 11 : i64} {
  func.func @_supcon_labels_kernel(%arg0: i32, %arg1: memref<16x1xi32, #tpu.memory_space<vmem>>, %arg2: memref<1x20xi32, #tpu.memory_space<vmem>>, %arg3: memref<16x1xf32, #tpu.memory_space<vmem>>, %arg4: memref<16x32xf32, #tpu.memory_space<vmem>>, %arg5: memref<20x32xf32, #tpu.memory_space<vmem>>, %arg6: memref<16x1xf32, #tpu.memory_space<vmem>>) attributes {dimension_semantics = [#tpu.dimension_semantics<parallel>], iteration_bounds = array<i64: 2>, scalar_prefetch = 0 : i64, scratch_operands = 0 : i64, tpu.core_type = #tpu.core_type<tc>, window_params = [{transform_indices = @transform_0, window_bounds = array<i64: 16, 1>}, {pipeline_mode = #tpu.pipeline_mode<synchronous>, transform_indices = @transform_1, window_bounds = array<i64: 1, 20>}, {transform_indices = @transform_2, window_bounds = array<i64: 16, 1>}, {transform_indices = @transform_3, window_bounds = array<i64: 16, 32>}, {pipeline_mode = #tpu.pipeline_mode<synchronous>, transform_indices = @transform_4, window_bounds = array<i64: 20, 32>}, {transform_indices = @transform_5, window_bounds = array<i64: 16, 1>}]} {
    %c16_i32 = arith.constant 16 : i32
    %0 = arith.muli %arg0, %c16_i32 : i32
    %c0 = arith.constant 0 : index
    %c0_0 = arith.constant 0 : index
    %1 = vector.load %arg4[%c0, %c0_0] : memref<16x32xf32, #tpu.memory_space<vmem>>, vector<16x32xf32>
    %c0_1 = arith.constant 0 : index
    %c0_2 = arith.constant 0 : index
    %2 = vector.load %arg5[%c0_1, %c0_2] : memref<20x32xf32, #tpu.memory_space<vmem>>, vector<20x32xf32>
    %cst = arith.constant dense<0.000000e+00> : vector<16x20xf32>
    %3 = tpu.matmul %1, %2, %cst {dimension_numbers = #tpu.dot_dimension_numbers<[1], [1], [0], [0], [0, 0, 1, 0], [], []>} : vector<16x32xf32>, vector<20x32xf32>, vector<16x20xf32> -> vector<16x20xf32>
    %4 = tpu.iota {dimensions = array<i32: 0>} : vector<16x1xi32>
    %5 = vector.broadcast %0 : i32 to vector<16x1xi32>
    %6 = arith.addi %5, %4 : vector<16x1xi32>
    %7 = tpu.iota {dimensions = array<i32: 1>} : vector<1x20xi32>
    %8 = vector.broadcast %7 : vector<1x20xi32> to vector<16x20xi32>
    %9 = vector.broadcast %6 : vector<16x1xi32> to vector<16x20xi32>
    %10 = arith.cmpi ne, %8, %9 : vector<16x20xi32>
    %c0_3 = arith.constant 0 : index
    %c0_4 = arith.constant 0 : index
    %11 = vector.load %arg1[%c0_3, %c0_4] : memref<16x1xi32, #tpu.memory_space<vmem>>, vector<16x1xi32>
    %c0_5 = arith.constant 0 : index
    %c0_6 = arith.constant 0 : index
    %12 = vector.load %arg2[%c0_5, %c0_6] : memref<1x20xi32, #tpu.memory_space<vmem>>, vector<1x20xi32>
    %13 = vector.broadcast %11 : vector<16x1xi32> to vector<16x20xi32>
    %14 = vector.broadcast %12 : vector<1x20xi32> to vector<16x20xi32>
    %15 = arith.cmpi eq, %13, %14 : vector<16x20xi32>
    %16 = arith.andi %15, %10 : vector<16x20xi1>
    %c0_7 = arith.constant 0 : index
    %c0_8 = arith.constant 0 : index
    %17 = vector.load %arg3[%c0_7, %c0_8] : memref<16x1xf32, #tpu.memory_space<vmem>>, vector<16x1xf32>
    %cst_9 = arith.constant dense<0xFF800000> : vector<16xf32>
    %18 = vector.multi_reduction <maximumf>, %3, %cst_9 [1] : vector<16x20xf32> to vector<16xf32>
    %19 = vector.shape_cast %18 : vector<16xf32> to vector<16x1xf32>
    %20 = vector.broadcast %19 : vector<16x1xf32> to vector<16x20xf32>
    %21 = arith.subf %3, %20 : vector<16x20xf32>
    %cst_10 = arith.constant 0.000000e+00 : f32
    %22 = vector.broadcast %cst_10 : f32 to vector<16x20xf32>
    %23 = math.exp %21 : vector<16x20xf32>
    %24 = arith.select %10, %23, %22 : vector<16x20xi1>, vector<16x20xf32>
    %cst_11 = arith.constant dense<0.000000e+00> : vector<16xf32>
    %25 = vector.multi_reduction <add>, %24, %cst_11 [1] : vector<16x20xf32> to vector<16xf32>
    %26 = vector.shape_cast %25 : vector<16xf32> to vector<16x1xf32>
    %27 = arith.select %16, %21, %22 : vector<16x20xi1>, vector<16x20xf32>
    %cst_12 = arith.constant dense<0.000000e+00> : vector<16xf32>
    %28 = vector.multi_reduction <add>, %27, %cst_12 [1] : vector<16x20xf32> to vector<16xf32>
    %29 = vector.shape_cast %28 : vector<16xf32> to vector<16x1xf32>
    %30 = arith.mulf %29, %17 : vector<16x1xf32>
    %31 = math.log %26 : vector<16x1xf32>
    %32 = arith.subf %30, %31 : vector<16x1xf32>
    %cst_13 = arith.constant -1.000000e+00 : f32
    %33 = vector.broadcast %cst_13 : f32 to vector<16x1xf32>
    %34 = arith.mulf %33, %32 : vector<16x1xf32>
    %c20_i32 = arith.constant 20 : i32
    %35 = vector.broadcast %c20_i32 : i32 to vector<16x1xi32>
    %36 = arith.cmpi slt, %6, %35 : vector<16x1xi32>
    %cst_14 = arith.constant 0.000000e+00 : f32
    %37 = vector.broadcast %cst_14 : f32 to vector<16x1xf32>
    %38 = arith.select %36, %34, %37 : vector<16x1xi1>, vector<16x1xf32>
    %c0_15 = arith.constant 0 : index
    %c0_16 = arith.constant 0 : index
    %39 = vector.load %arg6[%c0_15, %c0_16] : memref<16x1xf32, #tpu.memory_space<vmem>>, vector<16x1xf32>
    tpu.vector_store %arg6[%c0_15, %c0_16], %38 {strides = array<i32>} : memref<16x1xf32, #tpu.memory_space<vmem>>, vector<16x1xf32>,
    return
  }
  func.func @transform_0(%arg0: i32) -> (i32, i32) {
    %c0_i32 = arith.constant 0 : i32
    %c0_i32_0 = arith.constant 0 : i32
    return %arg0, %c0_i32 : i32, i32
  }
  func.func @transform_1(%arg0: i32) -> (i32, i32) {
    %c0_i32 = arith.constant 0 : i32
    %c0_i32_0 = arith.constant 0 : i32
    %c0_i32_1 = arith.constant 0 : i32
    return %c0_i32, %c0_i32_0 : i32, i32
  }
  func.func @transform_2(%arg0: i32) -> (i32, i32) {
    %c0_i32 = arith.constant 0 : i32
    %c0_i32_0 = arith.constant 0 : i32
    return %arg0, %c0_i32 : i32, i32
  }
  func.func @transform_3(%arg0: i32) -> (i32, i32) {
    %c0_i32 = arith.constant 0 : i32
    %c0_i32_0 = arith.constant 0 : i32
    return %arg0, %c0_i32 : i32, i32
  }
  func.func @transform_4(%arg0: i32) -> (i32, i32) {
    %c0_i32 = arith.constant 0 : i32
    %c0_i32_0 = arith.constant 0 : i32
    %c0_i32_1 = arith.constant 0 : i32
    return %c0_i32, %c0_i32_0 : i32, i32
  }
  func.func @transform_5(%arg0: i32) -> (i32, i32) {
    %c0_i32 = arith.constant 0 : i32
    %c0_i32_0 = arith.constant 0 : i32
    return %arg0, %c0_i32 : i32, i32
  }
}

module attributes {stable_mosaic.version = 11 : i64} {
  func.func @_supcon_labels_kernel(%arg0: i32, %arg1: memref<16x1xi32, #tpu.memory_space<vmem>>, %arg2: memref<1x20xi32, #tpu.memory_space<vmem>>, %arg3: memref<16x1xf32, #tpu.memory_space<vmem>>, %arg4: memref<16x32xf32, #tpu.memory_space<vmem>>, %arg5: memref<20x32xf32, #tpu.memory_space<vmem>>, %arg6: memref<16x1xf32, #tpu.memory_space<vmem>>) attributes {dimension_semantics = [#tpu.dimension_semantics<parallel>], iteration_bounds = array<i64: 2>, scalar_prefetch = 0 : i64, scratch_operands = 0 : i64, tpu.core_type = #tpu.core_type<tc>, window_params = [{transform_indices = @transform_0, window_bounds = array<i64: 16, 1>}, {pipeline_mode = #tpu.pipeline_mode<synchronous>, transform_indices = @transform_1, window_bounds = array<i64: 1, 20>}, {transform_indices = @transform_2, window_bounds = array<i64: 16, 1>}, {transform_indices = @transform_3, window_bounds = array<i64: 16, 32>}, {pipeline_mode = #tpu.pipeline_mode<synchronous>, transform_indices = @transform_4, window_bounds = array<i64: 20, 32>}, {transform_indices = @transform_5, window_bounds = array<i64: 16, 1>}]} {
    %c16_i32 = arith.constant 16 : i32
    %0 = arith.muli %arg0, %c16_i32 : i32
    %c0 = arith.constant 0 : index
    %c0_0 = arith.constant 0 : index
    %1 = vector.load %arg4[%c0, %c0_0] : memref<16x32xf32, #tpu.memory_space<vmem>>, vector<16x32xf32>
    %c0_1 = arith.constant 0 : index
    %c0_2 = arith.constant 0 : index
    %2 = vector.load %arg5[%c0_1, %c0_2] : memref<20x32xf32, #tpu.memory_space<vmem>>, vector<20x32xf32>
    %cst = arith.constant dense<0.000000e+00> : vector<16x20xf32>
    %3 = tpu.matmul %1, %2, %cst {dimension_numbers = #tpu.dot_dimension_numbers<[1], [1], [0], [0], [0, 0, 1, 0], [], []>} : vector<16x32xf32>, vector<20x32xf32>, vector<16x20xf32> -> vector<16x20xf32>
    %4 = tpu.iota {dimensions = array<i32: 0>} : vector<16x1xi32>
    %5 = vector.broadcast %0 : i32 to vector<16x1xi32>
    %6 = arith.addi %5, %4 : vector<16x1xi32>
    %7 = tpu.iota {dimensions = array<i32: 1>} : vector<1x20xi32>
    %8 = vector.broadcast %7 : vector<1x20xi32> to vector<16x20xi32>
    %9 = vector.broadcast %6 : vector<16x1xi32> to vector<16x20xi32>
    %10 = arith.cmpi ne, %8, %9 : vector<16x20xi32>
    %c0_3 = arith.constant 0 : index
    %c0_4 = arith.constant 0 : index
    %11 = vector.load %arg1[%c0_3, %c0_4] : memref<16x1xi32, #tpu.memory_space<vmem>>, vector<16x1xi32>
    %c0_5 = arith.constant 0 : index
    %c0_6 = arith.constant 0 : index
    %12 = vector.load %arg2[%c0_5, %c0_6] : memref<1x20xi32, #tpu.memory_space<vmem>>, vector<1x20xi32>
    %13 = vector.broadcast %11 : vector<16x1xi32> to vector<16x20xi32>
    %14 = vector.broadcast %12 : vector<1x20xi32> to vector<16x20xi32>
    %15 = arith.cmpi eq, %13, %14 : vector<16x20xi32>
    %16 = arith.andi %15, %10 : vector<16x20xi1>
    %c0_7 = arith.constant 0 : index
    %c0_8 = arith.constant 0 : index
    %17 = vector.load %arg3[%c0_7, %c0_8] : memref<16x1xf32, #tpu.memory_space<vmem>>, vector<16x1xf32>
    %cst_9 = arith.constant dense<0xFF800000> : vector<16xf32>
    %18 = vector.multi_reduction <maximumf>, %3, %cst_9 [1] : vector<16x20xf32> to vector<16xf32>
    %19 = vector.shape_cast %18 : vector<16xf32> to vector<16x1xf32>
    %20 = vector.broadcast %19 : vector<16x1xf32> to vector<16x20xf32>
    %21 = arith.subf %3, %20 : vector<16x20xf32>
    %cst_10 = arith.constant 0.000000e+00 : f32
    %22 = vector.broadcast %cst_10 : f32 to vector<16x20xf32>
    %23 = math.exp %21 : vector<16x20xf32>
    %24 = arith.select %10, %23, %22 : vector<16x20xi1>, vector<16x20xf32>
    %cst_11 = arith.constant dense<0.000000e+00> : vector<16xf32>
    %25 = vector.multi_reduction <add>, %24, %cst_11 [1] : vector<16x20xf32> to vector<16xf32>
    %26 = vector.shape_cast %25 : vector<16xf32> to vector<16x1xf32>
    %27 = arith.select %16, %21, %22 : vector<16x20xi1>, vector<16x20xf32>
    %cst_12 = arith.constant dense<0.000000e+00> : vector<16xf32>
    %28 = vector.multi_reduction <add>, %27, %cst_12 [1] : vector<16x20xf32> to vector<16xf32>
    %29 = vector.shape_cast %28 : vector<16xf32> to vector<16x1xf32>
    %30 = arith.mulf %29, %17 : vector<16x1xf32>
    %31 = math.log %26 : vector<16x1xf32>
    %32 = arith.subf %30, %31 : vector<16x1xf32>
    %cst_13 = arith.constant -1.000000e+00 : f32
    %33 = vector.broadcast %cst_13 : f32 to vector<16x1xf32>
    %34 = arith.mulf %33, %32 : vector<16x1xf32>
    %c20_i32 = arith.constant 20 : i32
    %35 = vector.broadcast %c20_i32 : i32 to vector<16x1xi32>
    %36 = arith.cmpi slt, %6, %35 : vector<16x1xi32>
    %cst_14 = arith.constant 0.000000e+00 : f32
    %37 = vector.broadcast %cst_14 : f32 to vector<16x1xf32>
    %38 = arith.select %36, %34, %37 : vector<16x1xi1>, vector<16x1xf32>
    %c0_15 = arith.constant 0 : index
    %c0_16 = arith.constant 0 : index
    %39 = vector.load %arg6[%c0_15, %c0_16] : memref<16x1xf32, #tpu.memory_space<vmem>>, vector<16x1xf32>
    tpu.vector_store %arg6[%c0_15, %c0_16], %38 {strides = array<i32>} : memref<16x1xf32, #tpu.memory_space<vmem>>, vector<16x1xf32>,
    return
  }
  func.func @transform_0(%arg0: i32) -> (i32, i32) {
    %c0_i32 = arith.constant 0 : i32
    %c0_i32_0 = arith.constant 0 : i32
    return %arg0, %c0_i32 : i32, i32
  }
  func.func @transform_1(%arg0: i32) -> (i32, i32) {
    %c0_i32 = arith.constant 0 : i32
    %c0_i32_0 = arith.constant 0 : i32
    %c0_i32_1 = arith.constant 0 : i32
    return %c0_i32, %c0_i32_0 : i32, i32
  }
  func.func @transform_2(%arg0: i32) -> (i32, i32) {
    %c0_i32 = arith.constant 0 : i32
    %c0_i32_0 = arith.constant 0 : i32
    return %arg0, %c0_i32 : i32, i32
  }
  func.func @transform_3(%arg0: i32) -> (i32, i32) {
    %c0_i32 = arith.constant 0 : i32
    %c0_i32_0 = arith.constant 0 : i32
    return %arg0, %c0_i32 : i32, i32
  }
  func.func @transform_4(%arg0: i32) -> (i32, i32) {
    %c0_i32 = arith.constant 0 : i32
    %c0_i32_0 = arith.constant 0 : i32
    %c0_i32_1 = arith.constant 0 : i32
    return %c0_i32, %c0_i32_0 : i32, i32
  }
  func.func @transform_5(%arg0: i32) -> (i32, i32) {
    %c0_i32 = arith.constant 0 : i32
    %c0_i32_0 = arith.constant 0 : i32
    return %arg0, %c0_i32 : i32, i32
  }
}

</mosaic_0001>

<llo_original>
// kernel: tpu_custom_call.1
$region0: #{tpu_custom_call.1}
  #allocation0 [shape = 'u32[]', space=smem, size = 0x4, offset = 0x4, fixed_abs, tag = 'smem constant byte address 0x4 - core index']
  #allocation1 [shape = 'u32[144,128]{1,0:T(1,128)}', space=vmem, size = 0x12000, scoped, tag = 'internal scratch']
  %s0 = inlined_call_operand.vmem [shape: s32[32,1], index: 0, kind: input, shape index: {}]
  %s1 = inlined_call_operand.vmem [shape: s32[1,20], index: 1, kind: input, shape index: {}]
  %s2 = inlined_call_operand.vmem [shape: f32[32,1], index: 2, kind: input, shape index: {}]
  %s3 = inlined_call_operand.vmem [shape: f32[32,32], index: 3, kind: input, shape index: {}]
  %s4 = inlined_call_operand.vmem [shape: f32[20,32], index: 4, kind: input, shape index: {}]
  %s5 = inlined_call_operand.vmem [shape: f32[32,1], index: 5, kind: output, shape index: {}]
  %s6 = sld [smem:[#allocation0]]
  $region53: #{tpu_custom_call.1} parent=0
    _
  %s8 = ssub.s32 1, %s6
  %s9 = scalar_select 0, %s8, %s6
  loop: start=0, step=1, limit=4
  $region2: #{tpu_custom_call.1} parent=0 // loop_pre_header
    _
  $region3: #{tpu_custom_call.1} parent=0 // loop_header
    %s11 = sphi 0, %s15
    %p12 = scmp.ge.s32.totalorder %s11, 4
    %s21 = sphi 0, %s23
    %s24 = sphi 0, %s21
    %s25 = sphi 0, %s24
    %s41 = sphi 0, %s25
    %s45 = sphi 0, %s45
    %s47 = sphi 0, %s45
    %s48 = sphi 0, %s47
    %s62 = sphi 0, %s48
    %s68 = sphi 0, %s70
    %s71 = sphi 0, %s68
    %s72 = sphi 0, %s71
    %s88 = sphi 0, %s72
    %s94 = sphi 0, %s96
    %s97 = sphi 0, %s94
    %s98 = sphi 0, %s97
    %s114 = sphi 0, %s98
    %s118 = sphi 0, %s118
    %s120 = sphi 0, %s118
    %s121 = sphi 0, %s120
    %s135 = sphi 0, %s121
    %s141 = sphi 0, %s143
    %s144 = sphi 0, %s141
    %s145 = sphi 0, %s144
    %s161 = sphi 0, %s145
  $region4: #{tpu_custom_call.1} parent=0 // loop_header_branch
    %14 = sbr.rel (%p12) target = $region8
  $region5: #{tpu_custom_call.1} parent=0 // loop_body
    %s16 = ssub.s32 %s11, 1
    %s17 = ssub.s32 %s11, 2
    %s18 = sadd.s32 %s11, 1
    %s19 = ssub.s32 %s11, %s18
    %p20 = scmp.eq.s32.totalorder %s19, 0
    %s22 = sadd.s32 %s21, 1
    %s23 = scalar_select %p20, %s21, %s22
    %p26 = pneg %p20
    %p27 = scmp.eq.s32.totalorder %s11, 1
    %p28 = por %p26, %p27
    %p29 = scmp.ne.s32.totalorder %s21, %s24
    %p30 = scmp.eq.s32.totalorder %s11, 0
    %p31 = por %p29, %p30
    %p32 = scmp.ne.s32.totalorder %s21, %s24
    %p33 = scmp.eq.s32.totalorder %s16, 1
    %p34 = por %p32, %p33
    %p35 = scmp.ne.s32.totalorder %s24, %s25
    %p36 = scmp.eq.s32.totalorder %s16, 0
    %p37 = por %p35, %p36
    %p38 = scmp.ne.s32.totalorder %s24, %s25
    %p39 = scmp.eq.s32.totalorder %s17, 1
    %p40 = por %p38, %p39
    %p42 = scmp.ne.s32.totalorder %s25, %s41
    %p43 = scmp.eq.s32.totalorder %s17, 0
    %p44 = por %p42, %p43
    %s46 = sadd.s32 %s45, 1
    %p49 = scmp.eq.s32.totalorder %s11, 1
    %p50 = scmp.ne.s32.totalorder %s45, %s47
    %p51 = scmp.eq.s32.totalorder %s11, 0
    %p52 = por %p50, %p51
    %p53 = scmp.ne.s32.totalorder %s45, %s47
    %p54 = scmp.eq.s32.totalorder %s16, 1
    %p55 = por %p53, %p54
    %p56 = scmp.ne.s32.totalorder %s47, %s48
    %p57 = scmp.eq.s32.totalorder %s16, 0
    %p58 = por %p56, %p57
    %p59 = scmp.ne.s32.totalorder %s47, %s48
    %p60 = scmp.eq.s32.totalorder %s17, 1
    %p61 = por %p59, %p60
    %p63 = scmp.ne.s32.totalorder %s48, %s62
    %p64 = scmp.eq.s32.totalorder %s17, 0
    %p65 = por %p63, %p64
    %s66 = ssub.s32 %s11, %s18
    %p67 = scmp.eq.s32.totalorder %s66, 0
    %s69 = sadd.s32 %s68, 1
    %s70 = scalar_select %p67, %s68, %s69
    %p73 = pneg %p67
    %p74 = scmp.eq.s32.totalorder %s11, 1
    %p75 = por %p73, %p74
    %p76 = scmp.ne.s32.totalorder %s68, %s71
    %p77 = scmp.eq.s32.totalorder %s11, 0
    %p78 = por %p76, %p77
    %p79 = scmp.ne.s32.totalorder %s68, %s71
    %p80 = scmp.eq.s32.totalorder %s16, 1
    %p81 = por %p79, %p80
    %p82 = scmp.ne.s32.totalorder %s71, %s72
    %p83 = scmp.eq.s32.totalorder %s16, 0
    %p84 = por %p82, %p83
    %p85 = scmp.ne.s32.totalorder %s71, %s72
    %p86 = scmp.eq.s32.totalorder %s17, 1
    %p87 = por %p85, %p86
    %p89 = scmp.ne.s32.totalorder %s72, %s88
    %p90 = scmp.eq.s32.totalorder %s17, 0
    %p91 = por %p89, %p90
    %s92 = ssub.s32 %s11, %s18
    %p93 = scmp.eq.s32.totalorder %s92, 0
    %s95 = sadd.s32 %s94, 1
    %s96 = scalar_select %p93, %s94, %s95
    %p99 = pneg %p93
    %p100 = scmp.eq.s32.totalorder %s11, 1
    %p101 = por %p99, %p100
    %p102 = scmp.ne.s32.totalorder %s94, %s97
    %p103 = scmp.eq.s32.totalorder %s11, 0
    %p104 = por %p102, %p103
    %p105 = scmp.ne.s32.totalorder %s94, %s97
    %p106 = scmp.eq.s32.totalorder %s16, 1
    %p107 = por %p105, %p106
    %p108 = scmp.ne.s32.totalorder %s97, %s98
    %p109 = scmp.eq.s32.totalorder %s16, 0
    %p110 = por %p108, %p109
    %p111 = scmp.ne.s32.totalorder %s97, %s98
    %p112 = scmp.eq.s32.totalorder %s17, 1
    %p113 = por %p111, %p112
    %p115 = scmp.ne.s32.totalorder %s98, %s114
    %p116 = scmp.eq.s32.totalorder %s17, 0
    %p117 = por %p115, %p116
    %s119 = sadd.s32 %s118, 1
    %p122 = scmp.eq.s32.totalorder %s11, 1
    %p123 = scmp.ne.s32.totalorder %s118, %s120
    %p124 = scmp.eq.s32.totalorder %s11, 0
    %p125 = por %p123, %p124
    %p126 = scmp.ne.s32.totalorder %s118, %s120
    %p127 = scmp.eq.s32.totalorder %s16, 1
    %p128 = por %p126, %p127
    %p129 = scmp.ne.s32.totalorder %s120, %s121
    %p130 = scmp.eq.s32.totalorder %s16, 0
    %p131 = por %p129, %p130
    %p132 = scmp.ne.s32.totalorder %s120, %s121
    %p133 = scmp.eq.s32.totalorder %s17, 1
    %p134 = por %p132, %p133
    %p136 = scmp.ne.s32.totalorder %s121, %s135
    %p137 = scmp.eq.s32.totalorder %s17, 0
    %p138 = por %p136, %p137
    %s139 = ssub.s32 %s11, %s18
    %p140 = scmp.eq.s32.totalorder %s139, 0
    %s142 = sadd.s32 %s141, 1
    %s143 = scalar_select %p140, %s141, %s142
    %p146 = pneg %p140
    %p147 = scmp.eq.s32.totalorder %s11, 1
    %p148 = por %p146, %p147
    %p149 = scmp.ne.s32.totalorder %s141, %s144
    %p150 = scmp.eq.s32.totalorder %s11, 0
    %p151 = por %p149, %p150
    %p152 = scmp.ne.s32.totalorder %s141, %s144
    %p153 = scmp.eq.s32.totalorder %s16, 1
    %p154 = por %p152, %p153
    %p155 = scmp.ne.s32.totalorder %s144, %s145
    %p156 = scmp.eq.s32.totalorder %s16, 0
    %p157 = por %p155, %p156
    %p158 = scmp.ne.s32.totalorder %s144, %s145
    %p159 = scmp.eq.s32.totalorder %s17, 1
    %p160 = por %p158, %p159
    %p162 = scmp.ne.s32.totalorder %s145, %s161
    %p163 = scmp.eq.s32.totalorder %s17, 0
    %p164 = por %p162, %p163
    %p165 = scmp.le.s32.totalorder 1, %s11
    %p166 = scmp.lt.s32.totalorder %s11, 3
    %p167 = pnand %p165, %p166
    %p168 = pneg %p167
    // Predicated region
    $region9: #{tpu_custom_call.1} parent=5 // pred_check
      _
    $region10: #{tpu_custom_call.1} parent=5 // pred_check_branch
      %170 = sbr.rel (%p167) target = $region12
    $region11: #{tpu_custom_call.1} parent=5 // pred_region
      %s171 = ssub.s32 %s11, 1
      // Predicated region
      $region13: #{tpu_custom_call.1} parent=11 // pred_check
        %p172 = pneg %p58
      $region14: #{tpu_custom_call.1} parent=11 // pred_check_branch
        %174 = sbr.rel (%p172) target = $region16
      $region15: #{tpu_custom_call.1} parent=11 // pred_region
        _
      $region16: #{tpu_custom_call.1} parent=11 // pred_fallthru
        _
      // Predicated region
      $region17: #{tpu_custom_call.1} parent=11 // pred_check
        %p175 = pneg %p131
      $region18: #{tpu_custom_call.1} parent=11 // pred_check_branch
        %177 = sbr.rel (%p175) target = $region20
      $region19: #{tpu_custom_call.1} parent=11 // pred_region
        _
      $region20: #{tpu_custom_call.1} parent=11 // pred_fallthru
        _
    $region12: #{tpu_custom_call.1} parent=5 // pred_fallthru
      _
    %p178 = scmp.lt.s32.totalorder %s11, 2
    // Predicated region
    $region21: #{tpu_custom_call.1} parent=5 // pred_check
      %p179 = pneg %p178
    $region22: #{tpu_custom_call.1} parent=5 // pred_check_branch
      %181 = sbr.rel (%p179) target = $region24
    $region23: #{tpu_custom_call.1} parent=5 // pred_region
      // Predicated region
      $region25: #{tpu_custom_call.1} parent=23 // pred_check
        %p182 = pneg %p31
      $region26: #{tpu_custom_call.1} parent=23 // pred_check_branch
        %184 = sbr.rel (%p182) target = $region28
      $region27: #{tpu_custom_call.1} parent=23 // pred_region
        %s185 = smul.u32 2, %s11
        %p186 = scmp.lt.s32.totalorder %s185, 3
        %s187 = scalar_select %p186, %s185, 3
        %s188 = smul.addr %s187, 8
        %s189 = scalar_lea.vmem %s0, %s188
        %s190 = smul.u32 2, %s11
      $region28: #{tpu_custom_call.1} parent=23 // pred_fallthru
        _
      // Predicated region
      $region29: #{tpu_custom_call.1} parent=23 // pred_check
        %p191 = pneg %p78
      $region30: #{tpu_custom_call.1} parent=23 // pred_check_branch
        %193 = sbr.rel (%p191) target = $region32
      $region31: #{tpu_custom_call.1} parent=23 // pred_region
        %s194 = smul.u32 2, %s11
        %p195 = scmp.lt.s32.totalorder %s194, 3
        %s196 = scalar_select %p195, %s194, 3
        %s197 = smul.addr %s196, 8
        %s198 = scalar_lea.vmem %s2, %s197
        %s199 = smul.u32 2, %s11
      $region32: #{tpu_custom_call.1} parent=23 // pred_fallthru
        _
      // Predicated region
      $region33: #{tpu_custom_call.1} parent=23 // pred_check
        %p200 = pneg %p104
      $region34: #{tpu_custom_call.1} parent=23 // pred_check_branch
        %202 = sbr.rel (%p200) target = $region36
      $region35: #{tpu_custom_call.1} parent=23 // pred_region
        %s203 = smul.u32 2, %s11
        %p204 = scmp.lt.s32.totalorder %s203, 3
        %s205 = scalar_select %p204, %s203, 3
        %s206 = smul.addr %s205, 8
        %s207 = scalar_lea.vmem %s3, %s206
        %s208 = smul.u32 2, %s11
      $region36: #{tpu_custom_call.1} parent=23 // pred_fallthru
        _
    $region24: #{tpu_custom_call.1} parent=5 // pred_fallthru
      _
    %p209 = scmp.le.s32.totalorder 1, %s11
    %p210 = scmp.lt.s32.totalorder %s11, 3
    %p211 = pnand %p209, %p210
    %p212 = pneg %p211
    // Predicated region
    $region37: #{tpu_custom_call.1} parent=5 // pred_check
      _
    $region38: #{tpu_custom_call.1} parent=5 // pred_check_branch
      %214 = sbr.rel (%p211) target = $region40
    $region39: #{tpu_custom_call.1} parent=5 // pred_region
      %s215 = ssub.s32 %s11, 1
      %s216 = smul.u32 2, %s16
      %p217 = scmp.lt.s32.totalorder %s216, 3
      %s218 = scalar_select %p217, %s216, 3
      %s219 = smul.addr %s218, 8
      %s220 = scalar_lea.vmem %s0, %s219
      %p221 = pneg %p37
      %p222 = pneg %p34
      %p223 = pneg %p58
      %p224 = pneg %p55
      %s225 = smul.u32 2, %s16
      %p226 = scmp.lt.s32.totalorder %s225, 3
      %s227 = scalar_select %p226, %s225, 3
      %s228 = smul.addr %s227, 8
      %s229 = scalar_lea.vmem %s2, %s228
      %p230 = pneg %p84
      %p231 = pneg %p81
      %s232 = smul.u32 2, %s16
      %p233 = scmp.lt.s32.totalorder %s232, 3
      %s234 = scalar_select %p233, %s232, 3
      %s235 = smul.addr %s234, 8
      %s236 = scalar_lea.vmem %s3, %s235
      %p237 = pneg %p110
      %p238 = pneg %p107
      %p239 = pneg %p131
      %p240 = pneg %p128
      %p241 = pneg %p157
      %p242 = pneg %p154
      %s243 = smul.u32 2, %s16
      %p244 = scmp.lt.s32.totalorder %s243, 3
      %s245 = scalar_select %p244, %s243, 3
      %s246 = smul.addr %s245, 8
      %s247 = scalar_lea.vmem %s5, %s246
      %s248 = smul.u32 2, %s16
      %p249 = scmp.lt.s32.totalorder %s248, 3
      %s250 = scalar_select %p249, %s248, 3
      %s251 = smul.addr %s250, 8
      %s252 = scalar_lea.vmem %s0, %s251
      %s253 = smul.u32 2, %s16
      %s254 = smul.u32 2, %s16
      %p255 = scmp.lt.s32.totalorder %s254, 3
      %s256 = scalar_select %p255, %s254, 3
      %s257 = smul.addr %s256, 8
      %s258 = scalar_lea.vmem %s2, %s257
      %s259 = smul.u32 2, %s16
      %s260 = smul.u32 2, %s16
      %p261 = scmp.lt.s32.totalorder %s260, 3
      %s262 = scalar_select %p261, %s260, 3
      %s263 = smul.addr %s262, 8
      %s264 = scalar_lea.vmem %s3, %s263
      %s265 = smul.u32 2, %s16
      %s266 = smul.u32 2, %s16
      %p267 = scmp.lt.s32.totalorder %s266, 3
      %s268 = scalar_select %p267, %s266, 3
      %s269 = smul.addr %s268, 8
      %s270 = scalar_lea.vmem %s5, %s269
      %s271 = smul.u32 2, %s16
      %s272 = smul.u32 %s16, 16
      %v273 = vld [vmem:[%s264] sm:$0xff]
      %v274 = vld [vmem:[%s264 + $0x8] sm:$0xff]
      %v275 = vld [vmem:[%s4] sm:$0xff]
      %v276 = vld [vmem:[%s4 + $0x8] sm:$0xff]
      %v277 = vld [vmem:[%s4 + $0x10] sm:$0xf]
      %vm278 = vcmask 261120
      %v280 = vsel %vm278, %v273, 0
      %v283 = vsel %vm278, %v274, 0
      %v286 = vsel %vm278, %v275, 0
      %v289 = vsel %vm278, %v276, 0
      %v292 = vsel %vm278, %v277, 0
      %294 = vmatprep.subr.mxu0 0.0
      %295 = vmatpush1.xpose.msra.mxu0 %v286
      %296 = vmatprep.subr.mxu0 0.0
      %297 = vmatpush1.xpose.msra.mxu0 %v289
      %298 = vmatprep.subr.mxu0 0.0
      %299 = vmatpush1.xpose.msra.mxu0 %v292
      %300 = vmatprep.subr.mxu0 0.0
      %301 = vmatpush1.xpose.msra.mxu0 0.0
      %302 = vmatprep.subr.mxu0 0.0
      %303 = vmatpush1.xpose.msra.mxu0 0.0
      %304 = vmatprep.subr.mxu0 0.0
      %305 = vmatpush1.xpose.msra.mxu0 0.0
      %306 = vmatprep.subr.mxu0 0.0
      %307 = vmatpush1.xpose.msra.mxu0 0.0
      %308 = vmatprep.subr.mxu0 0.0
      %309 = vmatpush1.xpose.msra.mxu0 0.0
      %310 = vmatprep.subr.mxu0 0.0
      %311 = vmatpush1.xpose.msra.mxu0 0.0
      %312 = vmatprep.subr.mxu0 0.0
      %313 = vmatpush1.xpose.msra.mxu0 0.0
      %314 = vmatprep.subr.mxu0 0.0
      %315 = vmatpush1.xpose.msra.mxu0 0.0
      %316 = vmatprep.subr.mxu0 0.0
      %317 = vmatpush1.xpose.msra.mxu0 0.0
      %318 = vmatprep.subr.mxu0 0.0
      %319 = vmatpush1.xpose.msra.mxu0 0.0
      %320 = vmatprep.subr.mxu0 0.0
      %321 = vmatpush1.xpose.msra.mxu0 0.0
      %322 = vmatprep.subr.mxu0 0.0
      %323 = vmatpush1.xpose.msra.mxu0 0.0
      %324 = vmatprep.subr.mxu0 0.0
      %325 = vmatpush1.xpose.msra.mxu0 0.0
      %326 = vmatprep.subr.mxu0 0.0
      %327 = vmatpush1.xpose.msra.mxu0 0.0
      %328 = vmatprep.subr.mxu0 0.0
      %329 = vmatpush1.xpose.msra.mxu0 0.0
      %330 = vmatprep.subr.mxu0 0.0
      %331 = vmatpush1.xpose.msra.mxu0 0.0
      %332 = vmatprep.subr.mxu0 0.0
      %333 = vmatpush1.xpose.msra.mxu0 0.0
      %334 = vmatprep.subr.mxu0 0.0
      %335 = vmatpush1.xpose.msra.mxu0 0.0
      %336 = vmatprep.subr.mxu0 0.0
      %337 = vmatpush1.xpose.msra.mxu0 0.0
      %338 = vmatprep.subr.mxu0 0.0
      %339 = vmatpush1.xpose.msra.mxu0 0.0
      %340 = vmatprep.subr.mxu0 0.0
      %341 = vmatpush1.xpose.msra.mxu0 0.0
      %342 = vmatprep.subr.mxu0 0.0
      %343 = vmatpush1.xpose.msra.mxu0 0.0
      %344 = vmatprep.subr.mxu0 0.0
      %345 = vmatpush1.xpose.msra.mxu0 0.0
      %346 = vmatprep.subr.mxu0 0.0
      %347 = vmatpush1.xpose.msra.mxu0 0.0
      %348 = vmatprep.subr.mxu0 0.0
      %349 = vmatpush1.xpose.msra.mxu0 0.0
      %350 = vmatprep.subr.mxu0 0.0
      %351 = vmatpush1.xpose.msra.mxu0 0.0
      %352 = vmatprep.subr.mxu0 0.0
      %353 = vmatpush1.xpose.msra.mxu0 0.0
      %354 = vmatprep.subr.mxu0 0.0
      %355 = vmatpush1.xpose.msra.mxu0 0.0
      %356 = vmatprep.subr.mxu0 0.0
      %357 = vmatpush1.xpose.msra.mxu0 0.0
      %358 = vmatprep.mubr.f32.mxu0 0.0
      %359 = vmatmul.mubr.f32.gmra.mrb[0].mxu0 %v280
      %v360 = vpop.f32.mrb[0].mxu0
      %v361 = vadd.f32 0.0, %v360
      %v362 = vpop.f32.mrb[0].mxu0
      %363 = vmatprep.mubr.f32.mxu0 0.0
      %364 = vmatmul.mubr.f32.gmra.mrb[0].mxu0 %v283
      %v365 = vpop.f32.mrb[0].mxu0
      %v366 = vadd.f32 0.0, %v365
      %v367 = vpop.f32.mrb[0].mxu0
      %368 = vdwg.mxu0
      %v369 = vlaneseq
      %v370 = vshrl.u32 %v369, 7
      %v371 = vadd.s32 %v370, 8
      %v372 = vstv %s272
      %v373 = vadd.s32 %v372, %v370
      %v374 = vadd.s32 %v372, %v371
      %v375 = vlaneseq
      %v376 = vand.u32 %v375, 127
      %vm377 = vcmp.ne.s32.totalorder %v376, %v373
      %vm378 = vcmp.ne.s32.totalorder %v376, %v374
      %v379 = vld [vmem:[%s252] sm:$0xff]
      %v380 = vld [vmem:[%s252 + $0x8] sm:$0xff]
      %v381 = vld [vmem:[%s1] sm:$0x1]
      %382 = vset.pattern.permute.xlu0 0
      %383 = vperm.xlu0 %382, %v379
      %v384 = vpop.permute.xlu0 %383
      %385 = vset.pattern.permute.xlu0 0
      %386 = vperm.xlu0 %385, %v380
      %v387 = vpop.permute.xlu0 %386
      %v388 = vlaneseq
      %v389 = vshrl.u32 %v388, 7
      %v390 = vsub.s32 0, %v389
      %v391 = vrot.slane %v381, %v390
      %vm392 = vcmp.eq.s32.totalorder %v384, %v391
      %vm393 = vcmp.eq.s32.totalorder %v387, %v391
      %vm394 = vmand %vm392, %vm377
      %vm395 = vmand %vm393, %vm378
      %v396 = vld [vmem:[%s258] sm:$0xff]
      %v397 = vld [vmem:[%s258 + $0x8] sm:$0xff]
      %vm398 = vcmask 162816
      %v399 = vsel %vm398, %v361, -inf
      %400 = vmax.xlane.f32.xlu0 %v399
      %v401 = vpop.xlane.xlu0 %400
      %v402 = vsel %vm398, %v366, -inf
      %403 = vmax.xlane.f32.xlu0 %v402
      %v404 = vpop.xlane.xlu0 %403
      %v405 = vsub.f32 %v361, %v401
      %v406 = vsub.f32 %v366, %v404
      %v407 = vmul.f32 %v405, 1.442695
      %v408 = vpow.pop %v407
      %v409 = vmul.f32 %v406, 1.442695
      %v410 = vpow.pop %v409
      %v411 = vsel %vm377, %v408, 0.0
      %v412 = vsel %vm378, %v410, 0.0
      %v413 = vsel %vm398, %v411, 0.0
      %414 = vadd.xlane.f32.xlu0 %v413
      %v415 = vpop.xlane.xlu0 %414
      %v416 = vsel %vm398, %v412, 0.0
      %417 = vadd.xlane.f32.xlu0 %v416
      %v418 = vpop.xlane.xlu0 %417
      %v419 = vsel %vm394, %v405, 0.0
      %v420 = vsel %vm395, %v406, 0.0
      %v421 = vsel %vm398, %v419, 0.0
      %422 = vadd.xlane.f32.xlu0 %v421
      %v423 = vpop.xlane.xlu0 %422
      %v424 = vsel %vm398, %v420, 0.0
      %425 = vadd.xlane.f32.xlu0 %v424
      %v426 = vpop.xlane.xlu0 %425
      %v427 = vmul.f32 %v423, %v396
      %v428 = vmul.f32 %v426, %v397
      %v429 = vlog2.pop %v415
      %v430 = vmul.f32 %v429, 0.6931472
      %v431 = vlog2.pop %v418
      %v432 = vmul.f32 %v431, 0.6931472
      %v433 = vsub.f32 %v427, %v430
      %v434 = vsub.f32 %v428, %v432
      %v435 = vmul.f32 %v433, -1.0
      %v436 = vmul.f32 %v434, -1.0
      %vm437 = vcmp.lt.s32.totalorder %v373, 20
      %vm438 = vcmp.lt.s32.totalorder %v374, 20
      %v439 = vsel %vm437, %v435, 0.0
      %v440 = vsel %vm438, %v436, 0.0
      %vm441 = vcmask 7168
      %442 = vst.msk [vmem:[%s270] sm:$0xff] %vm441, %v439
      %443 = vst.msk [vmem:[%s270 + $0x8] sm:$0xff] %vm441, %v440
      %s444 = smul.u32 2, %s16
      %p445 = scmp.lt.s32.totalorder %s444, 3
      %s446 = scalar_select %p445, %s444, 3
      %s447 = smul.addr %s446, 8
      %s448 = scalar_lea.vmem %s5, %s447
      // Predicated region
      $region41: #{tpu_custom_call.1} parent=39 // pred_check
        %p449 = pneg %p154
      $region42: #{tpu_custom_call.1} parent=39 // pred_check_branch
        %451 = sbr.rel (%p449) target = $region44
      $region43: #{tpu_custom_call.1} parent=39 // pred_region
        %s452 = smul.u32 2, %s16
      $region44: #{tpu_custom_call.1} parent=39 // pred_fallthru
        _
    $region40: #{tpu_custom_call.1} parent=5 // pred_fallthru
      _
    %p453 = scmp.le.s32.totalorder 2, %s11
    // Predicated region
    $region45: #{tpu_custom_call.1} parent=5 // pred_check
      %p454 = pneg %p453
    $region46: #{tpu_custom_call.1} parent=5 // pred_check_branch
      %456 = sbr.rel (%p454) target = $region48
    $region47: #{tpu_custom_call.1} parent=5 // pred_region
      %s457 = ssub.s32 %s11, 2
      // Predicated region
      $region49: #{tpu_custom_call.1} parent=47 // pred_check
        %p458 = pneg %p160
      $region50: #{tpu_custom_call.1} parent=47 // pred_check_branch
        %460 = sbr.rel (%p458) target = $region52
      $region51: #{tpu_custom_call.1} parent=47 // pred_region
        %s461 = smul.u32 2, %s17
        %p462 = scmp.lt.s32.totalorder %s461, 3
        %s463 = scalar_select %p462, %s461, 3
        %s464 = smul.addr %s463, 8
        %s465 = scalar_lea.vmem %s5, %s464
      $region52: #{tpu_custom_call.1} parent=47 // pred_fallthru
        _
    $region48: #{tpu_custom_call.1} parent=5 // pred_fallthru
      _
  $region6: #{tpu_custom_call.1} parent=0 // loop_footer
    %s15 = sadd.s32 1, %s11
  $region7: #{tpu_custom_call.1} parent=0 // loop_footer_branch
    %10 = sbr.rel target = $region3
  $region8: #{tpu_custom_call.1} parent=0 // loop_exit
    _

// kernel: tpu_custom_call.1
$region0: #{tpu_custom_call.1}
  #allocation0 [shape = 'u32[]', space=smem, size = 0x4, offset = 0x4, fixed_abs, tag = 'smem constant byte address 0x4 - core index']
  #allocation1 [shape = 'u32[144,128]{1,0:T(1,128)}', space=vmem, size = 0x12000, scoped, tag = 'internal scratch']
  %s0 = inlined_call_operand.vmem [shape: s32[32,1], index: 0, kind: input, shape index: {}]
  %s1 = inlined_call_operand.vmem [shape: s32[1,20], index: 1, kind: input, shape index: {}]
  %s2 = inlined_call_operand.vmem [shape: f32[32,1], index: 2, kind: input, shape index: {}]
  %s3 = inlined_call_operand.vmem [shape: f32[32,32], index: 3, kind: input, shape index: {}]
  %s4 = inlined_call_operand.vmem [shape: f32[20,32], index: 4, kind: input, shape index: {}]
  %s5 = inlined_call_operand.vmem [shape: f32[32,1], index: 5, kind: output, shape index: {}]
  %s6 = sld [smem:[#allocation0]]
  $region53: #{tpu_custom_call.1} parent=0
    _
  %s8 = ssub.s32 1, %s6
  %s9 = scalar_select 0, %s8, %s6
  loop: start=0, step=1, limit=4
  $region2: #{tpu_custom_call.1} parent=0 // loop_pre_header
    _
  $region3: #{tpu_custom_call.1} parent=0 // loop_header
    %s11 = sphi 0, %s15
    %p12 = scmp.ge.s32.totalorder %s11, 4
    %s21 = sphi 0, %s23
    %s24 = sphi 0, %s21
    %s25 = sphi 0, %s24
    %s41 = sphi 0, %s25
    %s45 = sphi 0, %s45
    %s47 = sphi 0, %s45
    %s48 = sphi 0, %s47
    %s62 = sphi 0, %s48
    %s68 = sphi 0, %s70
    %s71 = sphi 0, %s68
    %s72 = sphi 0, %s71
    %s88 = sphi 0, %s72
    %s94 = sphi 0, %s96
    %s97 = sphi 0, %s94
    %s98 = sphi 0, %s97
    %s114 = sphi 0, %s98
    %s118 = sphi 0, %s118
    %s120 = sphi 0, %s118
    %s121 = sphi 0, %s120
    %s135 = sphi 0, %s121
    %s141 = sphi 0, %s143
    %s144 = sphi 0, %s141
    %s145 = sphi 0, %s144
    %s161 = sphi 0, %s145
  $region4: #{tpu_custom_call.1} parent=0 // loop_header_branch
    %14 = sbr.rel (%p12) target = $region8
  $region5: #{tpu_custom_call.1} parent=0 // loop_body
    %s16 = ssub.s32 %s11, 1
    %s17 = ssub.s32 %s11, 2
    %s18 = sadd.s32 %s11, 1
    %s19 = ssub.s32 %s11, %s18
    %p20 = scmp.eq.s32.totalorder %s19, 0
    %s22 = sadd.s32 %s21, 1
    %s23 = scalar_select %p20, %s21, %s22
    %p26 = pneg %p20
    %p27 = scmp.eq.s32.totalorder %s11, 1
    %p28 = por %p26, %p27
    %p29 = scmp.ne.s32.totalorder %s21, %s24
    %p30 = scmp.eq.s32.totalorder %s11, 0
    %p31 = por %p29, %p30
    %p32 = scmp.ne.s32.totalorder %s21, %s24
    %p33 = scmp.eq.s32.totalorder %s16, 1
    %p34 = por %p32, %p33
    %p35 = scmp.ne.s32.totalorder %s24, %s25
    %p36 = scmp.eq.s32.totalorder %s16, 0
    %p37 = por %p35, %p36
    %p38 = scmp.ne.s32.totalorder %s24, %s25
    %p39 = scmp.eq.s32.totalorder %s17, 1
    %p40 = por %p38, %p39
    %p42 = scmp.ne.s32.totalorder %s25, %s41
    %p43 = scmp.eq.s32.totalorder %s17, 0
    %p44 = por %p42, %p43
    %s46 = sadd.s32 %s45, 1
    %p49 = scmp.eq.s32.totalorder %s11, 1
    %p50 = scmp.ne.s32.totalorder %s45, %s47
    %p51 = scmp.eq.s32.totalorder %s11, 0
    %p52 = por %p50, %p51
    %p53 = scmp.ne.s32.totalorder %s45, %s47
    %p54 = scmp.eq.s32.totalorder %s16, 1
    %p55 = por %p53, %p54
    %p56 = scmp.ne.s32.totalorder %s47, %s48
    %p57 = scmp.eq.s32.totalorder %s16, 0
    %p58 = por %p56, %p57
    %p59 = scmp.ne.s32.totalorder %s47, %s48
    %p60 = scmp.eq.s32.totalorder %s17, 1
    %p61 = por %p59, %p60
    %p63 = scmp.ne.s32.totalorder %s48, %s62
    %p64 = scmp.eq.s32.totalorder %s17, 0
    %p65 = por %p63, %p64
    %s66 = ssub.s32 %s11, %s18
    %p67 = scmp.eq.s32.totalorder %s66, 0
    %s69 = sadd.s32 %s68, 1
    %s70 = scalar_select %p67, %s68, %s69
    %p73 = pneg %p67
    %p74 = scmp.eq.s32.totalorder %s11, 1
    %p75 = por %p73, %p74
    %p76 = scmp.ne.s32.totalorder %s68, %s71
    %p77 = scmp.eq.s32.totalorder %s11, 0
    %p78 = por %p76, %p77
    %p79 = scmp.ne.s32.totalorder %s68, %s71
    %p80 = scmp.eq.s32.totalorder %s16, 1
    %p81 = por %p79, %p80
    %p82 = scmp.ne.s32.totalorder %s71, %s72
    %p83 = scmp.eq.s32.totalorder %s16, 0
    %p84 = por %p82, %p83
    %p85 = scmp.ne.s32.totalorder %s71, %s72
    %p86 = scmp.eq.s32.totalorder %s17, 1
    %p87 = por %p85, %p86
    %p89 = scmp.ne.s32.totalorder %s72, %s88
    %p90 = scmp.eq.s32.totalorder %s17, 0
    %p91 = por %p89, %p90
    %s92 = ssub.s32 %s11, %s18
    %p93 = scmp.eq.s32.totalorder %s92, 0
    %s95 = sadd.s32 %s94, 1
    %s96 = scalar_select %p93, %s94, %s95
    %p99 = pneg %p93
    %p100 = scmp.eq.s32.totalorder %s11, 1
    %p101 = por %p99, %p100
    %p102 = scmp.ne.s32.totalorder %s94, %s97
    %p103 = scmp.eq.s32.totalorder %s11, 0
    %p104 = por %p102, %p103
    %p105 = scmp.ne.s32.totalorder %s94, %s97
    %p106 = scmp.eq.s32.totalorder %s16, 1
    %p107 = por %p105, %p106
    %p108 = scmp.ne.s32.totalorder %s97, %s98
    %p109 = scmp.eq.s32.totalorder %s16, 0
    %p110 = por %p108, %p109
    %p111 = scmp.ne.s32.totalorder %s97, %s98
    %p112 = scmp.eq.s32.totalorder %s17, 1
    %p113 = por %p111, %p112
    %p115 = scmp.ne.s32.totalorder %s98, %s114
    %p116 = scmp.eq.s32.totalorder %s17, 0
    %p117 = por %p115, %p116
    %s119 = sadd.s32 %s118, 1
    %p122 = scmp.eq.s32.totalorder %s11, 1
    %p123 = scmp.ne.s32.totalorder %s118, %s120
    %p124 = scmp.eq.s32.totalorder %s11, 0
    %p125 = por %p123, %p124
    %p126 = scmp.ne.s32.totalorder %s118, %s120
    %p127 = scmp.eq.s32.totalorder %s16, 1
    %p128 = por %p126, %p127
    %p129 = scmp.ne.s32.totalorder %s120, %s121
    %p130 = scmp.eq.s32.totalorder %s16, 0
    %p131 = por %p129, %p130
    %p132 = scmp.ne.s32.totalorder %s120, %s121
    %p133 = scmp.eq.s32.totalorder %s17, 1
    %p134 = por %p132, %p133
    %p136 = scmp.ne.s32.totalorder %s121, %s135
    %p137 = scmp.eq.s32.totalorder %s17, 0
    %p138 = por %p136, %p137
    %s139 = ssub.s32 %s11, %s18
    %p140 = scmp.eq.s32.totalorder %s139, 0
    %s142 = sadd.s32 %s141, 1
    %s143 = scalar_select %p140, %s141, %s142
    %p146 = pneg %p140
    %p147 = scmp.eq.s32.totalorder %s11, 1
    %p148 = por %p146, %p147
    %p149 = scmp.ne.s32.totalorder %s141, %s144
    %p150 = scmp.eq.s32.totalorder %s11, 0
    %p151 = por %p149, %p150
    %p152 = scmp.ne.s32.totalorder %s141, %s144
    %p153 = scmp.eq.s32.totalorder %s16, 1
    %p154 = por %p152, %p153
    %p155 = scmp.ne.s32.totalorder %s144, %s145
    %p156 = scmp.eq.s32.totalorder %s16, 0
    %p157 = por %p155, %p156
    %p158 = scmp.ne.s32.totalorder %s144, %s145
    %p159 = scmp.eq.s32.totalorder %s17, 1
    %p160 = por %p158, %p159
    %p162 = scmp.ne.s32.totalorder %s145, %s161
    %p163 = scmp.eq.s32.totalorder %s17, 0
    %p164 = por %p162, %p163
    %p165 = scmp.le.s32.totalorder 1, %s11
    %p166 = scmp.lt.s32.totalorder %s11, 3
    %p167 = pnand %p165, %p166
    %p168 = pneg %p167
    // Predicated region
    $region9: #{tpu_custom_call.1} parent=5 // pred_check
      _
    $region10: #{tpu_custom_call.1} parent=5 // pred_check_branch
      %170 = sbr.rel (%p167) target = $region12
    $region11: #{tpu_custom_call.1} parent=5 // pred_region
      %s171 = ssub.s32 %s11, 1
      // Predicated region
      $region13: #{tpu_custom_call.1} parent=11 // pred_check
        %p172 = pneg %p58
      $region14: #{tpu_custom_call.1} parent=11 // pred_check_branch
        %174 = sbr.rel (%p172) target = $region16
      $region15: #{tpu_custom_call.1} parent=11 // pred_region
        _
      $region16: #{tpu_custom_call.1} parent=11 // pred_fallthru
        _
      // Predicated region
      $region17: #{tpu_custom_call.1} parent=11 // pred_check
        %p175 = pneg %p131
      $region18: #{tpu_custom_call.1} parent=11 // pred_check_branch
        %177 = sbr.rel (%p175) target = $region20
      $region19: #{tpu_custom_call.1} parent=11 // pred_region
        _
      $region20: #{tpu_custom_call.1} parent=11 // pred_fallthru
        _
    $region12: #{tpu_custom_call.1} parent=5 // pred_fallthru
      _
    %p178 = scmp.lt.s32.totalorder %s11, 2
    // Predicated region
    $region21: #{tpu_custom_call.1} parent=5 // pred_check
      %p179 = pneg %p178
    $region22: #{tpu_custom_call.1} parent=5 // pred_check_branch
      %181 = sbr.rel (%p179) target = $region24
    $region23: #{tpu_custom_call.1} parent=5 // pred_region
      // Predicated region
      $region25: #{tpu_custom_call.1} parent=23 // pred_check
        %p182 = pneg %p31
      $region26: #{tpu_custom_call.1} parent=23 // pred_check_branch
        %184 = sbr.rel (%p182) target = $region28
      $region27: #{tpu_custom_call.1} parent=23 // pred_region
        %s185 = smul.u32 2, %s11
        %p186 = scmp.lt.s32.totalorder %s185, 3
        %s187 = scalar_select %p186, %s185, 3
        %s188 = smul.addr %s187, 8
        %s189 = scalar_lea.vmem %s0, %s188
        %s190 = smul.u32 2, %s11
      $region28: #{tpu_custom_call.1} parent=23 // pred_fallthru
        _
      // Predicated region
      $region29: #{tpu_custom_call.1} parent=23 // pred_check
        %p191 = pneg %p78
      $region30: #{tpu_custom_call.1} parent=23 // pred_check_branch
        %193 = sbr.rel (%p191) target = $region32
      $region31: #{tpu_custom_call.1} parent=23 // pred_region
        %s194 = smul.u32 2, %s11
        %p195 = scmp.lt.s32.totalorder %s194, 3
        %s196 = scalar_select %p195, %s194, 3
        %s197 = smul.addr %s196, 8
        %s198 = scalar_lea.vmem %s2, %s197
        %s199 = smul.u32 2, %s11
      $region32: #{tpu_custom_call.1} parent=23 // pred_fallthru
        _
      // Predicated region
      $region33: #{tpu_custom_call.1} parent=23 // pred_check
        %p200 = pneg %p104
      $region34: #{tpu_custom_call.1} parent=23 // pred_check_branch
        %202 = sbr.rel (%p200) target = $region36
      $region35: #{tpu_custom_call.1} parent=23 // pred_region
        %s203 = smul.u32 2, %s11
        %p204 = scmp.lt.s32.totalorder %s203, 3
        %s205 = scalar_select %p204, %s203, 3
        %s206 = smul.addr %s205, 8
        %s207 = scalar_lea.vmem %s3, %s206
        %s208 = smul.u32 2, %s11
      $region36: #{tpu_custom_call.1} parent=23 // pred_fallthru
        _
    $region24: #{tpu_custom_call.1} parent=5 // pred_fallthru
      _
    %p209 = scmp.le.s32.totalorder 1, %s11
    %p210 = scmp.lt.s32.totalorder %s11, 3
    %p211 = pnand %p209, %p210
    %p212 = pneg %p211
    // Predicated region
    $region37: #{tpu_custom_call.1} parent=5 // pred_check
      _
    $region38: #{tpu_custom_call.1} parent=5 // pred_check_branch
      %214 = sbr.rel (%p211) target = $region40
    $region39: #{tpu_custom_call.1} parent=5 // pred_region
      %s215 = ssub.s32 %s11, 1
      %s216 = smul.u32 2, %s16
      %p217 = scmp.lt.s32.totalorder %s216, 3
      %s218 = scalar_select %p217, %s216, 3
      %s219 = smul.addr %s218, 8
      %s220 = scalar_lea.vmem %s0, %s219
      %p221 = pneg %p37
      %p222 = pneg %p34
      %p223 = pneg %p58
      %p224 = pneg %p55
      %s225 = smul.u32 2, %s16
      %p226 = scmp.lt.s32.totalorder %s225, 3
      %s227 = scalar_select %p226, %s225, 3
      %s228 = smul.addr %s227, 8
      %s229 = scalar_lea.vmem %s2, %s228
      %p230 = pneg %p84
      %p231 = pneg %p81
      %s232 = smul.u32 2, %s16
      %p233 = scmp.lt.s32.totalorder %s232, 3
      %s234 = scalar_select %p233, %s232, 3
      %s235 = smul.addr %s234, 8
      %s236 = scalar_lea.vmem %s3, %s235
      %p237 = pneg %p110
      %p238 = pneg %p107
      %p239 = pneg %p131
      %p240 = pneg %p128
      %p241 = pneg %p157
      %p242 = pneg %p154
      %s243 = smul.u32 2, %s16
      %p244 = scmp.lt.s32.totalorder %s243, 3
      %s245 = scalar_select %p244, %s243, 3
      %s246 = smul.addr %s245, 8
      %s247 = scalar_lea.vmem %s5, %s246
      %s248 = smul.u32 2, %s16
      %p249 = scmp.lt.s32.totalorder %s248, 3
      %s250 = scalar_select %p249, %s248, 3
      %s251 = smul.addr %s250, 8
      %s252 = scalar_lea.vmem %s0, %s251
      %s253 = smul.u32 2, %s16
      %s254 = smul.u32 2, %s16
      %p255 = scmp.lt.s32.totalorder %s254, 3
      %s256 = scalar_select %p255, %s254, 3
      %s257 = smul.addr %s256, 8
      %s258 = scalar_lea.vmem %s2, %s257
      %s259 = smul.u32 2, %s16
      %s260 = smul.u32 2, %s16
      %p261 = scmp.lt.s32.totalorder %s260, 3
      %s262 = scalar_select %p261, %s260, 3
      %s263 = smul.addr %s262, 8
      %s264 = scalar_lea.vmem %s3, %s263
      %s265 = smul.u32 2, %s16
      %s266 = smul.u32 2, %s16
      %p267 = scmp.lt.s32.totalorder %s266, 3
      %s268 = scalar_select %p267, %s266, 3
      %s269 = smul.addr %s268, 8
      %s270 = scalar_lea.vmem %s5, %s269
      %s271 = smul.u32 2, %s16
      %s272 = smul.u32 %s16, 16
      %v273 = vld [vmem:[%s264] sm:$0xff]
      %v274 = vld [vmem:[%s264 + $0x8] sm:$0xff]
      %v275 = vld [vmem:[%s4] sm:$0xff]
      %v276 = vld [vmem:[%s4 + $0x8] sm:$0xff]
      %v277 = vld [vmem:[%s4 + $0x10] sm:$0xf]
      %vm278 = vcmask 261120
      %v280 = vsel %vm278, %v273, 0
      %v283 = vsel %vm278, %v274, 0
      %v286 = vsel %vm278, %v275, 0
      %v289 = vsel %vm278, %v276, 0
      %v292 = vsel %vm278, %v277, 0
      %294 = vmatprep.subr.mxu0 0.0
      %295 = vmatpush1.xpose.msra.mxu0 %v286
      %296 = vmatprep.subr.mxu0 0.0
      %297 = vmatpush1.xpose.msra.mxu0 %v289
      %298 = vmatprep.subr.mxu0 0.0
      %299 = vmatpush1.xpose.msra.mxu0 %v292
      %300 = vmatprep.subr.mxu0 0.0
      %301 = vmatpush1.xpose.msra.mxu0 0.0
      %302 = vmatprep.subr.mxu0 0.0
      %303 = vmatpush1.xpose.msra.mxu0 0.0
      %304 = vmatprep.subr.mxu0 0.0
      %305 = vmatpush1.xpose.msra.mxu0 0.0
      %306 = vmatprep.subr.mxu0 0.0
      %307 = vmatpush1.xpose.msra.mxu0 0.0
      %308 = vmatprep.subr.mxu0 0.0
      %309 = vmatpush1.xpose.msra.mxu0 0.0
      %310 = vmatprep.subr.mxu0 0.0
      %311 = vmatpush1.xpose.msra.mxu0 0.0
      %312 = vmatprep.subr.mxu0 0.0
      %313 = vmatpush1.xpose.msra.mxu0 0.0
      %314 = vmatprep.subr.mxu0 0.0
      %315 = vmatpush1.xpose.msra.mxu0 0.0
      %316 = vmatprep.subr.mxu0 0.0
      %317 = vmatpush1.xpose.msra.mxu0 0.0
      %318 = vmatprep.subr.mxu0 0.0
      %319 = vmatpush1.xpose.msra.mxu0 0.0
      %320 = vmatprep.subr.mxu0 0.0
      %321 = vmatpush1.xpose.msra.mxu0 0.0
      %322 = vmatprep.subr.mxu0 0.0
      %323 = vmatpush1.xpose.msra.mxu0 0.0
      %324 = vmatprep.subr.mxu0 0.0
      %325 = vmatpush1.xpose.msra.mxu0 0.0
      %326 = vmatprep.subr.mxu0 0.0
      %327 = vmatpush1.xpose.msra.mxu0 0.0
      %328 = vmatprep.subr.mxu0 0.0
      %329 = vmatpush1.xpose.msra.mxu0 0.0
      %330 = vmatprep.subr.mxu0 0.0
      %331 = vmatpush1.xpose.msra.mxu0 0.0
      %332 = vmatprep.subr.mxu0 0.0
      %333 = vmatpush1.xpose.msra.mxu0 0.0
      %334 = vmatprep.subr.mxu0 0.0
      %335 = vmatpush1.xpose.msra.mxu0 0.0
      %336 = vmatprep.subr.mxu0 0.0
      %337 = vmatpush1.xpose.msra.mxu0 0.0
      %338 = vmatprep.subr.mxu0 0.0
      %339 = vmatpush1.xpose.msra.mxu0 0.0
      %340 = vmatprep.subr.mxu0 0.0
      %341 = vmatpush1.xpose.msra.mxu0 0.0
      %342 = vmatprep.subr.mxu0 0.0
      %343 = vmatpush1.xpose.msra.mxu0 0.0
      %344 = vmatprep.subr.mxu0 0.0
      %345 = vmatpush1.xpose.msra.mxu0 0.0
      %346 = vmatprep.subr.mxu0 0.0
      %347 = vmatpush1.xpose.msra.mxu0 0.0
      %348 = vmatprep.subr.mxu0 0.0
      %349 = vmatpush1.xpose.msra.mxu0 0.0
      %350 = vmatprep.subr.mxu0 0.0
      %351 = vmatpush1.xpose.msra.mxu0 0.0
      %352 = vmatprep.subr.mxu0 0.0
      %353 = vmatpush1.xpose.msra.mxu0 0.0
      %354 = vmatprep.subr.mxu0 0.0
      %355 = vmatpush1.xpose.msra.mxu0 0.0
      %356 = vmatprep.subr.mxu0 0.0
      %357 = vmatpush1.xpose.msra.mxu0 0.0
      %358 = vmatprep.mubr.f32.mxu0 0.0
      %359 = vmatmul.mubr.f32.gmra.mrb[0].mxu0 %v280
      %v360 = vpop.f32.mrb[0].mxu0
      %v361 = vadd.f32 0.0, %v360
      %v362 = vpop.f32.mrb[0].mxu0
      %363 = vmatprep.mubr.f32.mxu0 0.0
      %364 = vmatmul.mubr.f32.gmra.mrb[0].mxu0 %v283
      %v365 = vpop.f32.mrb[0].mxu0
      %v366 = vadd.f32 0.0, %v365
      %v367 = vpop.f32.mrb[0].mxu0
      %368 = vdwg.mxu0
      %v369 = vlaneseq
      %v370 = vshrl.u32 %v369, 7
      %v371 = vadd.s32 %v370, 8
      %v372 = vstv %s272
      %v373 = vadd.s32 %v372, %v370
      %v374 = vadd.s32 %v372, %v371
      %v375 = vlaneseq
      %v376 = vand.u32 %v375, 127
      %vm377 = vcmp.ne.s32.totalorder %v376, %v373
      %vm378 = vcmp.ne.s32.totalorder %v376, %v374
      %v379 = vld [vmem:[%s252] sm:$0xff]
      %v380 = vld [vmem:[%s252 + $0x8] sm:$0xff]
      %v381 = vld [vmem:[%s1] sm:$0x1]
      %382 = vset.pattern.permute.xlu0 0
      %383 = vperm.xlu0 %382, %v379
      %v384 = vpop.permute.xlu0 %383
      %385 = vset.pattern.permute.xlu0 0
      %386 = vperm.xlu0 %385, %v380
      %v387 = vpop.permute.xlu0 %386
      %v388 = vlaneseq
      %v389 = vshrl.u32 %v388, 7
      %v390 = vsub.s32 0, %v389
      %v391 = vrot.slane %v381, %v390
      %vm392 = vcmp.eq.s32.totalorder %v384, %v391
      %vm393 = vcmp.eq.s32.totalorder %v387, %v391
      %vm394 = vmand %vm392, %vm377
      %vm395 = vmand %vm393, %vm378
      %v396 = vld [vmem:[%s258] sm:$0xff]
      %v397 = vld [vmem:[%s258 + $0x8] sm:$0xff]
      %vm398 = vcmask 162816
      %v399 = vsel %vm398, %v361, -inf
      %400 = vmax.xlane.f32.xlu0 %v399
      %v401 = vpop.xlane.xlu0 %400
      %v402 = vsel %vm398, %v366, -inf
      %403 = vmax.xlane.f32.xlu0 %v402
      %v404 = vpop.xlane.xlu0 %403
      %v405 = vsub.f32 %v361, %v401
      %v406 = vsub.f32 %v366, %v404
      %v407 = vmul.f32 %v405, 1.442695
      %v408 = vpow.pop %v407
      %v409 = vmul.f32 %v406, 1.442695
      %v410 = vpow.pop %v409
      %v411 = vsel %vm377, %v408, 0.0
      %v412 = vsel %vm378, %v410, 0.0
      %v413 = vsel %vm398, %v411, 0.0
      %414 = vadd.xlane.f32.xlu0 %v413
      %v415 = vpop.xlane.xlu0 %414
      %v416 = vsel %vm398, %v412, 0.0
      %417 = vadd.xlane.f32.xlu0 %v416
      %v418 = vpop.xlane.xlu0 %417
      %v419 = vsel %vm394, %v405, 0.0
      %v420 = vsel %vm395, %v406, 0.0
      %v421 = vsel %vm398, %v419, 0.0
      %422 = vadd.xlane.f32.xlu0 %v421
      %v423 = vpop.xlane.xlu0 %422
      %v424 = vsel %vm398, %v420, 0.0
      %425 = vadd.xlane.f32.xlu0 %v424
      %v426 = vpop.xlane.xlu0 %425
      %v427 = vmul.f32 %v423, %v396
      %v428 = vmul.f32 %v426, %v397
      %v429 = vlog2.pop %v415
      %v430 = vmul.f32 %v429, 0.6931472
      %v431 = vlog2.pop %v418
      %v432 = vmul.f32 %v431, 0.6931472
      %v433 = vsub.f32 %v427, %v430
      %v434 = vsub.f32 %v428, %v432
      %v435 = vmul.f32 %v433, -1.0
      %v436 = vmul.f32 %v434, -1.0
      %vm437 = vcmp.lt.s32.totalorder %v373, 20
      %vm438 = vcmp.lt.s32.totalorder %v374, 20
      %v439 = vsel %vm437, %v435, 0.0
      %v440 = vsel %vm438, %v436, 0.0
      %vm441 = vcmask 7168
      %442 = vst.msk [vmem:[%s270] sm:$0xff] %vm441, %v439
      %443 = vst.msk [vmem:[%s270 + $0x8] sm:$0xff] %vm441, %v440
      %s444 = smul.u32 2, %s16
      %p445 = scmp.lt.s32.totalorder %s444, 3
      %s446 = scalar_select %p445, %s444, 3
      %s447 = smul.addr %s446, 8
      %s448 = scalar_lea.vmem %s5, %s447
      // Predicated region
      $region41: #{tpu_custom_call.1} parent=39 // pred_check
        %p449 = pneg %p154
      $region42: #{tpu_custom_call.1} parent=39 // pred_check_branch
        %451 = sbr.rel (%p449) target = $region44
      $region43: #{tpu_custom_call.1} parent=39 // pred_region
        %s452 = smul.u32 2, %s16
      $region44: #{tpu_custom_call.1} parent=39 // pred_fallthru
        _
    $region40: #{tpu_custom_call.1} parent=5 // pred_fallthru
      _
    %p453 = scmp.le.s32.totalorder 2, %s11
    // Predicated region
    $region45: #{tpu_custom_call.1} parent=5 // pred_check
      %p454 = pneg %p453
    $region46: #{tpu_custom_call.1} parent=5 // pred_check_branch
      %456 = sbr.rel (%p454) target = $region48
    $region47: #{tpu_custom_call.1} parent=5 // pred_region
      %s457 = ssub.s32 %s11, 2
      // Predicated region
      $region49: #{tpu_custom_call.1} parent=47 // pred_check
        %p458 = pneg %p160
      $region50: #{tpu_custom_call.1} parent=47 // pred_check_branch
        %460 = sbr.rel (%p458) target = $region52
      $region51: #{tpu_custom_call.1} parent=47 // pred_region
        %s461 = smul.u32 2, %s17
        %p462 = scmp.lt.s32.totalorder %s461, 3
        %s463 = scalar_select %p462, %s461, 3
        %s464 = smul.addr %s463, 8
        %s465 = scalar_lea.vmem %s5, %s464
      $region52: #{tpu_custom_call.1} parent=47 // pred_fallthru
        _
    $region48: #{tpu_custom_call.1} parent=5 // pred_fallthru
      _
  $region6: #{tpu_custom_call.1} parent=0 // loop_footer
    %s15 = sadd.s32 1, %s11
  $region7: #{tpu_custom_call.1} parent=0 // loop_footer_branch
    %10 = sbr.rel target = $region3
  $region8: #{tpu_custom_call.1} parent=0 // loop_exit
    _

</llo_original>
